<compile_context>
chip_gen: v6e
topology: v6e:2x2x1
jax: 0.10.0
libtpu: 0.0.40
codegen_flags: <defaults>
</compile_context>

<pallas_src>
import math

import jax
import jax.numpy as jnp
from jax.experimental import pallas as pl
from jax.experimental.pallas import tpu as pltpu

_INV_SQRT2 = 1.0 / math.sqrt(2.0)


def _round_up(a, b):
    return (a + b - 1) // b * b


def _cdiv(a, b):
    return -(-a // b)


# ---------------------------------------------------------------------------
# Kernels
# ---------------------------------------------------------------------------
def _mlp_fused_kernel(x_ref, w1_ref, b1_ref, w2_ref, b2_ref, o_ref):
    """Whole-hidden-dim fused tile: y = GELU(x@W1+b1) @ W2' + b2.

    The GELU constant 0.5 is folded into W2 by the wrapper, so here the
    activation is h * (1 + erf(h/sqrt(2))). Dropout(p=0) is the identity.
    """
    x = x_ref[...].astype(w1_ref.dtype)          # in-kernel cast; hides under MXU
    h = jnp.dot(x, w1_ref[...], preferred_element_type=jnp.float32) + b1_ref[...]
    g = h * (1.0 + jax.lax.erf(h * _INV_SQRT2))  # f32 GELU (x2; 0.5 folded into W2)
    y = jnp.dot(g.astype(w2_ref.dtype), w2_ref[...],
                preferred_element_type=jnp.float32) + b2_ref[...]
    o_ref[...] = y.astype(o_ref.dtype)


def _mlp_streamed_kernel(x_ref, w1_ref, b1_ref, w2_ref, b2_ref, o_ref, acc_ref):
    """Hidden-dim-streamed fallback (weights too big for VMEM, e.g. on v7x).

    Grid = (row_tiles, hidden_tiles); per step j accumulate the partial
    GELU(x @ W1[:, j] + b1[j]) @ W2[j, :] into an f32 accumulator, add b2 and
    write the output on the last hidden step.
    """
    j = pl.program_id(1)

    @pl.when(j == 0)
    def _init():
        acc_ref[...] = jnp.zeros_like(acc_ref)

    x = x_ref[...].astype(w1_ref.dtype)
    h = jnp.dot(x, w1_ref[...], preferred_element_type=jnp.float32) + b1_ref[...]
    g = h * (1.0 + jax.lax.erf(h * _INV_SQRT2))
    acc_ref[...] += jnp.dot(g.astype(w2_ref.dtype), w2_ref[...],
                            preferred_element_type=jnp.float32)

    @pl.when(j == pl.num_programs(1) - 1)
    def _finalize():
        o_ref[...] = (acc_ref[...] + b2_ref[...]).astype(o_ref.dtype)


# ---------------------------------------------------------------------------
# Wrapper
# ---------------------------------------------------------------------------
def _vmem_capacity_bytes():
    """Physical per-core VMEM; conservative v7x value if the query fails."""
    try:
        cap = int(getattr(pltpu.get_tpu_info(), "vmem_capacity_bytes"))
        if cap > 0:
            return cap
    except Exception:
        pass
    return 64 * 1024 * 1024   # v7x (smallest per-core VMEM)


def _pick_row_tiling(M, tm_max):
    """Choose (n_steps, tm, Mp) with minimal row padding; keep >=2 (even)
    steps when there is enough work so v7x's two TensorCores both get rows."""
    n_steps = max(1, _cdiv(M, tm_max))
    if M >= 256:
        n_steps = max(n_steps, 2)
    if n_steps > 1 and n_steps % 2 == 1:
        n_steps += 1
    tm = max(8, _round_up(_cdiv(M, n_steps), 8))   # <= tm_max by construction
    return n_steps, tm, n_steps * tm


def mlp_block(x, w1, b1, w2, b2, *, tm=512, compute_dtype=jnp.bfloat16,
              hidden_tile=None, force_streamed=False, vmem_budget_bytes=None):
    """MLP-Mixer MlpBlock forward: Linear -> GELU -> Dropout(0) -> Linear -> Dropout(0).

    x: (B, T, D_in); w1: (D_in, D_h); b1: (D_h,); w2: (D_h, D_in); b2: (D_in,).

    compute_dtype: dtype fed to the MXU (x tile, W1, W2). Defaults to bf16 on
    all TPU generations (v5e/v6e/v7x all emulate f32 matmul as multi-pass bf16,
    so bf16 inputs give ~2-3x MXU throughput and half the resident-weight
    VMEM). Accumulation, bias adds and the GELU stay f32. Pass jnp.float32 to
    force full precision, or an fp8 dtype on v7x if the model tolerates it.
    """
    B, T, D_in = x.shape
    D_h = w1.shape[1]
    M = B * T

    cdt = jnp.dtype(compute_dtype)
    c_sz = cdt.itemsize
    x_sz = jnp.dtype(x.dtype).itemsize
    out_dtype = x.dtype
    o_sz = jnp.dtype(out_dtype).itemsize

    cap = _vmem_capacity_bytes()
    budget = (int(vmem_budget_bytes) if vmem_budget_bytes is not None
              else int(cap * 0.75))                 # ~48 MiB v7x, ~96 MiB v5e/v6e

    # Lane-dense feature dims (multiples of 128) -> unmasked stores, full vregs.
    Dp_in = _round_up(D_in, 128)
    Dp_h = _round_up(D_h, 128)

    tm_req = max(8, _round_up(int(tm), 8))
    tm_cap = min(tm_req, _round_up(M, 8))

    # Conservative VMEM footprints: weights double-buffered (Buffered(1) only
    # adds headroom), out tile at out dtype, f32 hidden + compute-dtype copies
    # of x and gelu(h); a 1.5x compiler-scratch margin is applied to the limit.
    def fused_bytes(t, dh):
        wts = 2 * (2 * Dp_in * dh * c_sz + (dh + Dp_in) * 4)
        io = 2 * t * Dp_in * (x_sz + o_sz)
        inter = t * dh * (4 + c_sz) + t * Dp_in * c_sz
        return wts + io + inter

    def streamed_bytes(t, th):
        wts = 2 * (2 * Dp_in * th * c_sz + th * 4 + Dp_in * 4)
        io = 2 * t * Dp_in * (x_sz + o_sz)
        inter = t * th * (4 + c_sz) + t * Dp_in * c_sz
        return wts + io + inter + t * Dp_in * 4     # + f32 accumulator

    use_streamed = force_streamed or fused_bytes(min(tm_cap, 128), Dp_h) > budget

    if not use_streamed:
        t = tm_cap
        while t > 8 and fused_bytes(t, Dp_h) > budget:
            t = max(8, _round_up(t // 2, 8))
        n_rows, tm_sel, Mp = _pick_row_tiling(M, t)
        th = Dp_h
        Dp_h_used = Dp_h
        n_h = 1
        footprint = fused_bytes(tm_sel, Dp_h_used)
    else:
        th = min(Dp_h, _round_up(int(hidden_tile), 128) if hidden_tile else 2048)
        t = tm_cap
        while streamed_bytes(t, th) > budget and th > 128:
            th = max(128, _round_up(th // 2, 128))
        while streamed_bytes(t, th) > budget and t > 8:
            t = max(8, _round_up(t // 2, 8))
        n_rows, tm_sel, Mp = _pick_row_tiling(M, t)
        Dp_h_used = _round_up(D_h, th)
        n_h = Dp_h_used // th
        footprint = streamed_bytes(tm_sel, th)

    # --- Inputs / params. x stays in its native dtype (cast happens in-kernel);
    # only pad when actually misaligned. Zero padding contributes exact zeros.
    x2 = x.reshape(M, D_in)
    if (Mp, Dp_in) != (M, D_in):
        x2 = jnp.pad(x2, ((0, Mp - M), (0, Dp_in - D_in)))

    w1p = jnp.pad(w1.astype(cdt), ((0, Dp_in - D_in), (0, Dp_h_used - D_h)))
    # Fold GELU's 0.5 into W2 (exact power-of-two scale; saves one VPU mul/elem).
    w2p = jnp.pad((0.5 * w2).astype(cdt), ((0, Dp_h_used - D_h), (0, Dp_in - D_in)))
    b1p = jnp.pad(b1.astype(jnp.float32), (0, Dp_h_used - D_h)).reshape(1, Dp_h_used)
    b2p = jnp.pad(b2.astype(jnp.float32), (0, Dp_in - D_in)).reshape(1, Dp_in)

    vmem_limit = int(min(cap, max(32 * 1024 * 1024, int(footprint * 1.5))))

    cost = pl.CostEstimate(
        flops=2 * 2 * Mp * Dp_in * Dp_h_used,          # two matmuls
        transcendentals=Mp * Dp_h_used,                # erf per hidden element
        bytes_accessed=(Mp * Dp_in * (x_sz + o_sz)     # x in + y out (HBM dtypes)
                        + 2 * Dp_in * Dp_h_used * c_sz # weights
                        + (Dp_h_used + Dp_in) * 4))    # biases

    if use_streamed:
        grid_spec = pltpu.PrefetchScalarGridSpec(
            num_scalar_prefetch=0,
            grid=(n_rows, n_h),
            in_specs=[
                pl.BlockSpec((tm_sel, Dp_in), lambda i, j: (i, 0)),   # x rows (resident over j)
                pl.BlockSpec((Dp_in, th), lambda i, j: (0, j)),       # W1 column block (streamed)
                pl.BlockSpec((1, th), lambda i, j: (0, j)),           # b1 block
                pl.BlockSpec((th, Dp_in), lambda i, j: (j, 0)),       # W2 row block (streamed)
                pl.BlockSpec((1, Dp_in), lambda i, j: (0, 0)),        # b2
            ],
            out_specs=pl.BlockSpec((tm_sel, Dp_in), lambda i, j: (i, 0)),
            scratch_shapes=[pltpu.VMEM((tm_sel, Dp_in), jnp.float32)],
        )
        out = pl.pallas_call(
            _mlp_streamed_kernel,
            out_shape=jax.ShapeDtypeStruct((Mp, Dp_in), out_dtype),
            grid_spec=grid_spec,
            compiler_params=pltpu.CompilerParams(
                dimension_semantics=("parallel", "arbitrary"),
                vmem_limit_bytes=vmem_limit),
            cost_estimate=cost,
        )(x2, w1p, b1p, w2p, b2p)
    else:
        def call_fused(single_buffer_weights):
            # Constant-index weights/biases: request a single VMEM buffer
            # (halves resident-weight VMEM); fall back to default buffering
            # if this Pallas build rejects pipeline_mode=Buffered(1).
            wkw = ({"pipeline_mode": pl.Buffered(1)}
                   if single_buffer_weights else {})
            grid_spec = pltpu.PrefetchScalarGridSpec(
                num_scalar_prefetch=0,
                grid=(n_rows,),
                in_specs=[
                    pl.BlockSpec((tm_sel, Dp_in), lambda i: (i, 0)),        # x (pipelined)
                    pl.BlockSpec((Dp_in, Dp_h_used), lambda i: (0, 0), **wkw),  # W1 (resident)
                    pl.BlockSpec((1, Dp_h_used), lambda i: (0, 0), **wkw),      # b1
                    pl.BlockSpec((Dp_h_used, Dp_in), lambda i: (0, 0), **wkw),  # W2 (resident)
                    pl.BlockSpec((1, Dp_in), lambda i: (0, 0), **wkw),          # b2
                ],
                out_specs=pl.BlockSpec((tm_sel, Dp_in), lambda i: (i, 0)),
            )
            return pl.pallas_call(
                _mlp_fused_kernel,
                out_shape=jax.ShapeDtypeStruct((Mp, Dp_in), out_dtype),
                grid_spec=grid_spec,
                compiler_params=pltpu.CompilerParams(
                    dimension_semantics=("parallel",),
                    vmem_limit_bytes=vmem_limit),
                cost_estimate=cost,
            )(x2, w1p, b1p, w2p, b2p)

        try:
            out = call_fused(True)
        except Exception:   # Buffered(1) unsupported here -> default double-buffering
            out = call_fused(False)

    if (Mp, Dp_in) != (M, D_in):
        out = out[:M, :D_in]
    return out.reshape(B, T, D_in)


def init_params(key, input_dim, hidden_dim, dtype=jnp.float32):
    """Deterministic init mirroring nn.Linear (uniform +/- 1/sqrt(fan_in)).
    Weights stored as (in, out) so the kernel computes x @ W (== x @ W_torch.T)."""
    k1, k2, k3, k4 = jax.random.split(key, 4)
    lim1 = 1.0 / math.sqrt(input_dim)
    lim2 = 1.0 / math.sqrt(hidden_dim)
    w1 = jax.random.uniform(k1, (input_dim, hidden_dim), dtype, -lim1, lim1)
    b1 = jax.random.uniform(k2, (hidden_dim,), dtype, -lim1, lim1)
    w2 = jax.random.uniform(k3, (hidden_dim, input_dim), dtype, -lim2, lim2)
    b2 = jax.random.uniform(k4, (input_dim,), dtype, -lim2, lim2)
    return w1, b1, w2, b2


if __name__ == "__main__":
    key = jax.random.PRNGKey(0)
    kx, kp = jax.random.split(key)

    batch, tokens, input_dim, hidden_dim = 2, 8, 32, 64
    x = jax.random.normal(kx, (batch, tokens, input_dim), jnp.float32)
    w1, b1, w2, b2 = init_params(kp, input_dim, hidden_dim)

    def reference(x, w1, b1, w2, b2, cdt=jnp.bfloat16):
        # Same precision recipe as the kernel: bf16 MXU inputs, f32 accumulation,
        # f32 erf-GELU, Dropout(p=0) = identity.
        xm = x.reshape(-1, x.shape[-1]).astype(cdt)
        h = jnp.dot(xm, w1.astype(cdt), preferred_element_type=jnp.float32) + b1
        h = 0.5 * h * (1.0 + jax.lax.erf(h * _INV_SQRT2))
        y = jnp.dot(h.astype(cdt), w2.astype(cdt),
                    preferred_element_type=jnp.float32) + b2
        return y.reshape(x.shape)

    # Default (fused, resident-weight) path.
    y = jax.block_until_ready(mlp_block(x, w1, b1, w2, b2))
    y_ref = reference(x, w1, b1, w2, b2)
    assert y.shape == y_ref.shape
    assert jnp.allclose(y, y_ref, atol=1e-2, rtol=1e-2), \
        float(jnp.max(jnp.abs(y - y_ref)))

    # Also exercise the hidden-dim-streamed fallback (the v7x big-weight path):
    # 2 hidden tiles -> real multi-step accumulation through the scratch.
    hidden_dim2 = 256
    w1b, b1b, w2b, b2b = init_params(jax.random.PRNGKey(1), input_dim, hidden_dim2)
    y2 = jax.block_until_ready(
        mlp_block(x, w1b, b1b, w2b, b2b, force_streamed=True, hidden_tile=128))
    y2_ref = reference(x, w1b, b1b, w2b, b2b)
    assert y2.shape == y2_ref.shape
    assert jnp.allclose(y2, y2_ref, atol=1e-2, rtol=1e-2), \
        float(jnp.max(jnp.abs(y2 - y2_ref)))

    print("KERNEL_OK")
</pallas_src>

<mosaic_0001>
module attributes {stable_mosaic.version = 11 : i64} {
  func.func @_mlp_fused_kernel(%arg0: i32, %arg1: memref<16x128xf32, #tpu.memory_space<vmem>>, %arg2: memref<128x128xbf16, #tpu.memory_space<vmem>>, %arg3: memref<1x128xf32, #tpu.memory_space<vmem>>, %arg4: memref<128x128xbf16, #tpu.memory_space<vmem>>, %arg5: memref<1x128xf32, #tpu.memory_space<vmem>>, %arg6: memref<16x128xf32, #tpu.memory_space<vmem>>) attributes {dimension_semantics = [#tpu.dimension_semantics<parallel>], iteration_bounds = array<i64: 1>, scalar_prefetch = 0 : i64, scratch_operands = 0 : i64, tpu.core_type = #tpu.core_type<tc>, window_params = [{transform_indices = @transform_0, window_bounds = array<i64: 16, 128>}, {pipeline_mode = #tpu.pipeline_mode<synchronous>, transform_indices = @transform_1, window_bounds = array<i64: 128, 128>}, {pipeline_mode = #tpu.pipeline_mode<synchronous>, transform_indices = @transform_2, window_bounds = array<i64: 1, 128>}, {pipeline_mode = #tpu.pipeline_mode<synchronous>, transform_indices = @transform_3, window_bounds = array<i64: 128, 128>}, {pipeline_mode = #tpu.pipeline_mode<synchronous>, transform_indices = @transform_4, window_bounds = array<i64: 1, 128>}, {transform_indices = @transform_5, window_bounds = array<i64: 16, 128>}]} {
    %c0 = arith.constant 0 : index
    %c0_0 = arith.constant 0 : index
    %0 = vector.load %arg1[%c0, %c0_0] : memref<16x128xf32, #tpu.memory_space<vmem>>, vector<16x128xf32>
    %1 = arith.truncf %0 : vector<16x128xf32> to vector<16x128xbf16>
    %c0_1 = arith.constant 0 : index
    %c0_2 = arith.constant 0 : index
    %2 = vector.load %arg2[%c0_1, %c0_2] : memref<128x128xbf16, #tpu.memory_space<vmem>>, vector<128x128xbf16>
    %cst = arith.constant dense<0.000000e+00> : vector<16x128xf32>
    %3 = tpu.matmul %1, %2, %cst {dimension_numbers = #tpu.dot_dimension_numbers<[1], [0], [0], [1], [0, 0, 1, 1], [], []>} : vector<16x128xbf16>, vector<128x128xbf16>, vector<16x128xf32> -> vector<16x128xf32>
    %c0_3 = arith.constant 0 : index
    %c0_4 = arith.constant 0 : index
    %4 = vector.load %arg3[%c0_3, %c0_4] : memref<1x128xf32, #tpu.memory_space<vmem>>, vector<1x128xf32>
    %5 = vector.broadcast %4 : vector<1x128xf32> to vector<16x128xf32>
    %6 = arith.addf %3, %5 : vector<16x128xf32>
    %cst_5 = arith.constant 0.707106769 : f32
    %7 = vector.broadcast %cst_5 : f32 to vector<16x128xf32>
    %8 = arith.mulf %6, %7 : vector<16x128xf32>
    %9 = math.erf %8 : vector<16x128xf32>
    %cst_6 = arith.constant 1.000000e+00 : f32
    %10 = vector.broadcast %cst_6 : f32 to vector<16x128xf32>
    %11 = arith.addf %10, %9 : vector<16x128xf32>
    %12 = arith.mulf %6, %11 : vector<16x128xf32>
    %13 = arith.truncf %12 : vector<16x128xf32> to vector<16x128xbf16>
    %c0_7 = arith.constant 0 : index
    %c0_8 = arith.constant 0 : index
    %14 = vector.load %arg4[%c0_7, %c0_8] : memref<128x128xbf16, #tpu.memory_space<vmem>>, vector<128x128xbf16>
    %cst_9 = arith.constant dense<0.000000e+00> : vector<16x128xf32>
    %15 = tpu.matmul %13, %14, %cst_9 {dimension_numbers = #tpu.dot_dimension_numbers<[1], [0], [0], [1], [0, 0, 1, 1], [], []>} : vector<16x128xbf16>, vector<128x128xbf16>, vector<16x128xf32> -> vector<16x128xf32>
    %c0_10 = arith.constant 0 : index
    %c0_11 = arith.constant 0 : index
    %16 = vector.load %arg5[%c0_10, %c0_11] : memref<1x128xf32, #tpu.memory_space<vmem>>, vector<1x128xf32>
    %17 = vector.broadcast %16 : vector<1x128xf32> to vector<16x128xf32>
    %18 = arith.addf %15, %17 : vector<16x128xf32>
    %c0_12 = arith.constant 0 : index
    %c0_13 = arith.constant 0 : index
    %19 = vector.load %arg6[%c0_12, %c0_13] : memref<16x128xf32, #tpu.memory_space<vmem>>, vector<16x128xf32>
    tpu.vector_store %arg6[%c0_12, %c0_13], %18 {strides = array<i32>} : memref<16x128xf32, #tpu.memory_space<vmem>>, vector<16x128xf32>,
    return
  }
  func.func @transform_0(%arg0: i32) -> (i32, i32) {
    %c0_i32 = arith.constant 0 : i32
    %c0_i32_0 = arith.constant 0 : i32
    return %arg0, %c0_i32 : i32, i32
  }
  func.func @transform_1(%arg0: i32) -> (i32, i32) {
    %c0_i32 = arith.constant 0 : i32
    %c0_i32_0 = arith.constant 0 : i32
    %c0_i32_1 = arith.constant 0 : i32
    return %c0_i32, %c0_i32_0 : i32, i32
  }
  func.func @transform_2(%arg0: i32) -> (i32, i32) {
    %c0_i32 = arith.constant 0 : i32
    %c0_i32_0 = arith.constant 0 : i32
    %c0_i32_1 = arith.constant 0 : i32
    return %c0_i32, %c0_i32_0 : i32, i32
  }
  func.func @transform_3(%arg0: i32) -> (i32, i32) {
    %c0_i32 = arith.constant 0 : i32
    %c0_i32_0 = arith.constant 0 : i32
    %c0_i32_1 = arith.constant 0 : i32
    return %c0_i32, %c0_i32_0 : i32, i32
  }
  func.func @transform_4(%arg0: i32) -> (i32, i32) {
    %c0_i32 = arith.constant 0 : i32
    %c0_i32_0 = arith.constant 0 : i32
    %c0_i32_1 = arith.constant 0 : i32
    return %c0_i32, %c0_i32_0 : i32, i32
  }
  func.func @transform_5(%arg0: i32) -> (i32, i32) {
    %c0_i32 = arith.constant 0 : i32
    %c0_i32_0 = arith.constant 0 : i32
    return %arg0, %c0_i32 : i32, i32
  }
}

module attributes {stable_mosaic.version = 11 : i64} {
  func.func @_mlp_fused_kernel(%arg0: i32, %arg1: memref<16x128xf32, #tpu.memory_space<vmem>>, %arg2: memref<128x128xbf16, #tpu.memory_space<vmem>>, %arg3: memref<1x128xf32, #tpu.memory_space<vmem>>, %arg4: memref<128x128xbf16, #tpu.memory_space<vmem>>, %arg5: memref<1x128xf32, #tpu.memory_space<vmem>>, %arg6: memref<16x128xf32, #tpu.memory_space<vmem>>) attributes {dimension_semantics = [#tpu.dimension_semantics<parallel>], iteration_bounds = array<i64: 1>, scalar_prefetch = 0 : i64, scratch_operands = 0 : i64, tpu.core_type = #tpu.core_type<tc>, window_params = [{transform_indices = @transform_0, window_bounds = array<i64: 16, 128>}, {pipeline_mode = #tpu.pipeline_mode<synchronous>, transform_indices = @transform_1, window_bounds = array<i64: 128, 128>}, {pipeline_mode = #tpu.pipeline_mode<synchronous>, transform_indices = @transform_2, window_bounds = array<i64: 1, 128>}, {pipeline_mode = #tpu.pipeline_mode<synchronous>, transform_indices = @transform_3, window_bounds = array<i64: 128, 128>}, {pipeline_mode = #tpu.pipeline_mode<synchronous>, transform_indices = @transform_4, window_bounds = array<i64: 1, 128>}, {transform_indices = @transform_5, window_bounds = array<i64: 16, 128>}]} {
    %c0 = arith.constant 0 : index
    %c0_0 = arith.constant 0 : index
    %0 = vector.load %arg1[%c0, %c0_0] : memref<16x128xf32, #tpu.memory_space<vmem>>, vector<16x128xf32>
    %1 = arith.truncf %0 : vector<16x128xf32> to vector<16x128xbf16>
    %c0_1 = arith.constant 0 : index
    %c0_2 = arith.constant 0 : index
    %2 = vector.load %arg2[%c0_1, %c0_2] : memref<128x128xbf16, #tpu.memory_space<vmem>>, vector<128x128xbf16>
    %cst = arith.constant dense<0.000000e+00> : vector<16x128xf32>
    %3 = tpu.matmul %1, %2, %cst {dimension_numbers = #tpu.dot_dimension_numbers<[1], [0], [0], [1], [0, 0, 1, 1], [], []>} : vector<16x128xbf16>, vector<128x128xbf16>, vector<16x128xf32> -> vector<16x128xf32>
    %c0_3 = arith.constant 0 : index
    %c0_4 = arith.constant 0 : index
    %4 = vector.load %arg3[%c0_3, %c0_4] : memref<1x128xf32, #tpu.memory_space<vmem>>, vector<1x128xf32>
    %5 = vector.broadcast %4 : vector<1x128xf32> to vector<16x128xf32>
    %6 = arith.addf %3, %5 : vector<16x128xf32>
    %cst_5 = arith.constant 0.707106769 : f32
    %7 = vector.broadcast %cst_5 : f32 to vector<16x128xf32>
    %8 = arith.mulf %6, %7 : vector<16x128xf32>
    %9 = math.erf %8 : vector<16x128xf32>
    %cst_6 = arith.constant 1.000000e+00 : f32
    %10 = vector.broadcast %cst_6 : f32 to vector<16x128xf32>
    %11 = arith.addf %10, %9 : vector<16x128xf32>
    %12 = arith.mulf %6, %11 : vector<16x128xf32>
    %13 = arith.truncf %12 : vector<16x128xf32> to vector<16x128xbf16>
    %c0_7 = arith.constant 0 : index
    %c0_8 = arith.constant 0 : index
    %14 = vector.load %arg4[%c0_7, %c0_8] : memref<128x128xbf16, #tpu.memory_space<vmem>>, vector<128x128xbf16>
    %cst_9 = arith.constant dense<0.000000e+00> : vector<16x128xf32>
    %15 = tpu.matmul %13, %14, %cst_9 {dimension_numbers = #tpu.dot_dimension_numbers<[1], [0], [0], [1], [0, 0, 1, 1], [], []>} : vector<16x128xbf16>, vector<128x128xbf16>, vector<16x128xf32> -> vector<16x128xf32>
    %c0_10 = arith.constant 0 : index
    %c0_11 = arith.constant 0 : index
    %16 = vector.load %arg5[%c0_10, %c0_11] : memref<1x128xf32, #tpu.memory_space<vmem>>, vector<1x128xf32>
    %17 = vector.broadcast %16 : vector<1x128xf32> to vector<16x128xf32>
    %18 = arith.addf %15, %17 : vector<16x128xf32>
    %c0_12 = arith.constant 0 : index
    %c0_13 = arith.constant 0 : index
    %19 = vector.load %arg6[%c0_12, %c0_13] : memref<16x128xf32, #tpu.memory_space<vmem>>, vector<16x128xf32>
    tpu.vector_store %arg6[%c0_12, %c0_13], %18 {strides = array<i32>} : memref<16x128xf32, #tpu.memory_space<vmem>>, vector<16x128xf32>,
    return
  }
  func.func @transform_0(%arg0: i32) -> (i32, i32) {
    %c0_i32 = arith.constant 0 : i32
    %c0_i32_0 = arith.constant 0 : i32
    return %arg0, %c0_i32 : i32, i32
  }
  func.func @transform_1(%arg0: i32) -> (i32, i32) {
    %c0_i32 = arith.constant 0 : i32
    %c0_i32_0 = arith.constant 0 : i32
    %c0_i32_1 = arith.constant 0 : i32
    return %c0_i32, %c0_i32_0 : i32, i32
  }
  func.func @transform_2(%arg0: i32) -> (i32, i32) {
    %c0_i32 = arith.constant 0 : i32
    %c0_i32_0 = arith.constant 0 : i32
    %c0_i32_1 = arith.constant 0 : i32
    return %c0_i32, %c0_i32_0 : i32, i32
  }
  func.func @transform_3(%arg0: i32) -> (i32, i32) {
    %c0_i32 = arith.constant 0 : i32
    %c0_i32_0 = arith.constant 0 : i32
    %c0_i32_1 = arith.constant 0 : i32
    return %c0_i32, %c0_i32_0 : i32, i32
  }
  func.func @transform_4(%arg0: i32) -> (i32, i32) {
    %c0_i32 = arith.constant 0 : i32
    %c0_i32_0 = arith.constant 0 : i32
    %c0_i32_1 = arith.constant 0 : i32
    return %c0_i32, %c0_i32_0 : i32, i32
  }
  func.func @transform_5(%arg0: i32) -> (i32, i32) {
    %c0_i32 = arith.constant 0 : i32
    %c0_i32_0 = arith.constant 0 : i32
    return %arg0, %c0_i32 : i32, i32
  }
}

</mosaic_0001>

<llo_original>
// kernel: tpu_custom_call.1
$region0: #{tpu_custom_call.1}
  #allocation0 [shape = 'u32[]', space=smem, size = 0x4, offset = 0x4, fixed_abs, tag = 'smem constant byte address 0x4 - core index']
  #allocation1 [shape = 'u32[144,128]{1,0:T(1,128)}', space=vmem, size = 0x12000, scoped, tag = 'internal scratch']
  %s0 = inlined_call_operand.hbm [shape: f32[16,128], index: 0, kind: input, shape index: {}]
  %s1 = inlined_call_operand.hbm [shape: bf16[128,128], index: 1, kind: input, shape index: {}]
  %s2 = inlined_call_operand.vmem [shape: f32[1,128], index: 2, kind: input, shape index: {}]
  %s3 = inlined_call_operand.hbm [shape: bf16[128,128], index: 3, kind: input, shape index: {}]
  %s4 = inlined_call_operand.vmem [shape: f32[1,128], index: 4, kind: input, shape index: {}]
  %s5 = inlined_call_operand.hbm [shape: f32[16,128], index: 5, kind: output, shape index: {}]
  %s6 = sld [smem:[#allocation0]]
  $region42: #{tpu_custom_call.1} parent=0
    _
  %s8 = ssub.s32 1, %s6
  %s9 = scalar_select 0, %s8, %s6
  $region1: #{tpu_custom_call.1} parent=0
    #allocation2 [shape = 'u8[8192]{0}', space=vmem, size = 0x2000, scoped, tag = 'input window, operand 0, single buffered']
    #allocation3 [shape = 's32[1]{0}', space=sflag, size = 0x4, scoped, tag = 'scoped memory for tpu_custom_call.1']
    #allocation4 [shape = 's32[1]{0}', space=sflag, size = 0x4, scoped, tag = 'scoped memory for tpu_custom_call.1']
    #allocation5 [shape = 'u8[32768]{0}', space=vmem, size = 0x8000, scoped, tag = 'input window, operand 1, single buffered']
    #allocation6 [shape = 's32[1]{0}', space=sflag, size = 0x4, scoped, tag = 'scoped memory for tpu_custom_call.1']
    #allocation7 [shape = 'u8[32768]{0}', space=vmem, size = 0x8000, scoped, tag = 'input window, operand 3, single buffered']
    #allocation8 [shape = 'u8[8192]{0}', space=vmem, size = 0x2000, scoped, tag = 'output window, operand 0, single buffered']
    %10 = vsyncpa [#allocation3], 0
    %11 = vsyncpa [#allocation6], 0
    %12 = vsyncpa [#allocation4], 0
    // Predicated region
    $region2: #{tpu_custom_call.1} parent=1 // pred_check
      _
    $region3: #{tpu_custom_call.1} parent=1 // pred_check_branch
      %14 = sbr.rel (0) target = $region5
    $region4: #{tpu_custom_call.1} parent=1 // pred_region
      %s16 = ssub.s32 256, 256
      %17 = vsyncadd [#allocation3], %s16
      %s18 = sshll.u32 [#allocation2], 4
      %s19 = int_to_ptr.vmem [resolvable:$true] %s18
      %24 = dma.hbm_to_vmem [thread:$0]  %s0, 256, %s19, [#allocation3], 128, 128, 8
    $region5: #{tpu_custom_call.1} parent=1 // pred_fallthru
      _
    // Predicated region
    $region6: #{tpu_custom_call.1} parent=1 // pred_check
      _
    $region7: #{tpu_custom_call.1} parent=1 // pred_check_branch
      %26 = sbr.rel (0) target = $region9
    $region8: #{tpu_custom_call.1} parent=1 // pred_region
      %s28 = ssub.s32 1024, 1024
      %29 = vsyncadd [#allocation6], %s28
      %s30 = sshll.u32 [#allocation5], 4
      %s31 = int_to_ptr.vmem [resolvable:$true] %s30
      %36 = dma.hbm_to_vmem [thread:$0]  %s1, 1024, %s31, [#allocation6], 64, 64, 4
    $region9: #{tpu_custom_call.1} parent=1 // pred_fallthru
      _
    // Predicated region
    $region10: #{tpu_custom_call.1} parent=1 // pred_check
      _
    $region11: #{tpu_custom_call.1} parent=1 // pred_check_branch
      %38 = sbr.rel (0) target = $region13
    $region12: #{tpu_custom_call.1} parent=1 // pred_region
      _
    $region13: #{tpu_custom_call.1} parent=1 // pred_fallthru
      _
    // Predicated region
    $region14: #{tpu_custom_call.1} parent=1 // pred_check
      _
    $region15: #{tpu_custom_call.1} parent=1 // pred_check_branch
      %40 = sbr.rel (0) target = $region17
    $region16: #{tpu_custom_call.1} parent=1 // pred_region
      %s42 = ssub.s32 1024, 1024
      %43 = vsyncadd [#allocation6], %s42
      %s44 = sshll.u32 [#allocation7], 4
      %s45 = int_to_ptr.vmem [resolvable:$true] %s44
      %50 = dma.hbm_to_vmem [thread:$0]  %s3, 1024, %s45, [#allocation6], 64, 64, 4
    $region17: #{tpu_custom_call.1} parent=1 // pred_fallthru
      _
    // Predicated region
    $region18: #{tpu_custom_call.1} parent=1 // pred_check
      _
    $region19: #{tpu_custom_call.1} parent=1 // pred_check_branch
      %52 = sbr.rel (0) target = $region21
    $region20: #{tpu_custom_call.1} parent=1 // pred_region
      _
    $region21: #{tpu_custom_call.1} parent=1 // pred_fallthru
      _
    // Predicated region
    $region22: #{tpu_custom_call.1} parent=1 // pred_check
      _
    $region23: #{tpu_custom_call.1} parent=1 // pred_check_branch
      %54 = sbr.rel (0) target = $region25
    $region24: #{tpu_custom_call.1} parent=1 // pred_region
      %55 = dma.done [#allocation3], 256
    $region25: #{tpu_custom_call.1} parent=1 // pred_fallthru
      _
    // Predicated region
    $region26: #{tpu_custom_call.1} parent=1 // pred_check
      _
    $region27: #{tpu_custom_call.1} parent=1 // pred_check_branch
      %57 = sbr.rel (0) target = $region29
    $region28: #{tpu_custom_call.1} parent=1 // pred_region
      %58 = dma.done [#allocation6], 1024
    $region29: #{tpu_custom_call.1} parent=1 // pred_fallthru
      _
    // Predicated region
    $region30: #{tpu_custom_call.1} parent=1 // pred_check
      _
    $region31: #{tpu_custom_call.1} parent=1 // pred_check_branch
      %60 = sbr.rel (0) target = $region33
    $region32: #{tpu_custom_call.1} parent=1 // pred_region
      %61 = dma.done [#allocation6], 1024
    $region33: #{tpu_custom_call.1} parent=1 // pred_fallthru
      _
    %v63 = vld [vmem:[#allocation2] sm:$0xff]
    %v64 = vld [vmem:[#allocation2 + $0x8] sm:$0xff]
    %v65 = vpack.c.bf16 %v64, %v63
    %v66 = vld [vmem:[#allocation5] sm:$0xf]
    %v67 = vld [vmem:[#allocation5 + $0x4] sm:$0xf]
    %v68 = vld [vmem:[#allocation5 + $0x8] sm:$0xf]
    %v69 = vld [vmem:[#allocation5 + $0xc] sm:$0xf]
    %v70 = vld [vmem:[#allocation5 + $0x10] sm:$0xf]
    %v71 = vld [vmem:[#allocation5 + $0x14] sm:$0xf]
    %v72 = vld [vmem:[#allocation5 + $0x18] sm:$0xf]
    %v73 = vld [vmem:[#allocation5 + $0x1c] sm:$0xf]
    %v74 = vld [vmem:[#allocation5 + $0x20] sm:$0xf]
    %v75 = vld [vmem:[#allocation5 + $0x24] sm:$0xf]
    %v76 = vld [vmem:[#allocation5 + $0x28] sm:$0xf]
    %v77 = vld [vmem:[#allocation5 + $0x2c] sm:$0xf]
    %v78 = vld [vmem:[#allocation5 + $0x30] sm:$0xf]
    %v79 = vld [vmem:[#allocation5 + $0x34] sm:$0xf]
    %v80 = vld [vmem:[#allocation5 + $0x38] sm:$0xf]
    %v81 = vld [vmem:[#allocation5 + $0x3c] sm:$0xf]
    %v82 = vld [vmem:[%s2] sm:$0x1]
    %v84 = vlaneseq
    %v85 = vshrl.u32 %v84, 7
    %v86 = vsub.s32 0, %v85
    %v87 = vrot.slane %v82, %v86
    %v105 = vunpack.c.l.b16 %v66
    %v106 = vunpack.c.l.b16 %v67
    %v107 = vunpack.c.l.b16 %v68
    %v108 = vunpack.c.l.b16 %v69
    %v109 = vunpack.c.l.b16 %v70
    %v110 = vunpack.c.l.b16 %v71
    %v111 = vunpack.c.l.b16 %v72
    %v112 = vunpack.c.l.b16 %v73
    %v113 = vunpack.c.l.b16 %v74
    %v114 = vunpack.c.l.b16 %v75
    %v115 = vunpack.c.l.b16 %v76
    %v116 = vunpack.c.l.b16 %v77
    %v117 = vunpack.c.l.b16 %v78
    %v118 = vunpack.c.l.b16 %v79
    %v119 = vunpack.c.l.b16 %v80
    %v120 = vunpack.c.l.b16 %v81
    %v121 = vpack.c.b16 %v106, %v105
    %v122 = vpack.c.b16 %v108, %v107
    %v123 = vpack.c.b16 %v110, %v109
    %v124 = vpack.c.b16 %v112, %v111
    %v125 = vpack.c.b16 %v114, %v113
    %v126 = vpack.c.b16 %v116, %v115
    %v127 = vpack.c.b16 %v118, %v117
    %v128 = vpack.c.b16 %v120, %v119
    %137 = vmatprep.subr.bf16.mxu0 0
    %138 = vmatpush1.bf16.msra.mxu0 %v128
    %139 = vmatprep.subr.bf16.mxu0 0
    %140 = vmatpush1.bf16.msra.mxu0 %v127
    %141 = vmatprep.subr.bf16.mxu0 0
    %142 = vmatpush1.bf16.msra.mxu0 %v126
    %143 = vmatprep.subr.bf16.mxu0 0
    %144 = vmatpush1.bf16.msra.mxu0 %v125
    %145 = vmatprep.subr.bf16.mxu0 0
    %146 = vmatpush1.bf16.msra.mxu0 %v124
    %147 = vmatprep.subr.bf16.mxu0 0
    %148 = vmatpush1.bf16.msra.mxu0 %v123
    %149 = vmatprep.subr.bf16.mxu0 0
    %150 = vmatpush1.bf16.msra.mxu0 %v122
    %151 = vmatprep.subr.bf16.mxu0 0
    %152 = vmatpush1.bf16.msra.mxu0 %v121
    %153 = vmatprep.subr.bf16.mxu0 0
    %154 = vmatpush2.bf16.msra.mxu0 0
    %155 = vmatprep.subr.bf16.mxu0 0
    %156 = vmatpush2.bf16.msra.mxu0 0
    %157 = vmatprep.subr.bf16.mxu0 0
    %158 = vmatpush2.bf16.msra.mxu0 0
    %159 = vmatprep.subr.bf16.mxu0 0
    %160 = vmatpush2.bf16.msra.mxu0 0
    %161 = vmatprep.subr.bf16.mxu0 0
    %162 = vmatpush2.bf16.msra.mxu0 0
    %163 = vmatprep.subr.bf16.mxu0 0
    %164 = vmatpush2.bf16.msra.mxu0 0
    %165 = vmatprep.subr.bf16.mxu0 0
    %166 = vmatpush2.bf16.msra.mxu0 0
    %167 = vmatprep.subr.bf16.mxu0 0
    %168 = vmatpush2.bf16.msra.mxu0 0
    %169 = vmatprep.mubr.bf16.mxu0 0
    %170 = vmatmul.mubr.bf16.gmra.mxu0 %v65
    %v171 = vpop.f32.mrf.mxu0
    %v172 = vadd.f32 %v87, %v171
    %v173 = vpop.f32.mrf.mxu0
    %v174 = vpop.f32.mrf.mxu0
    %v175 = vadd.f32 %v87, %v174
    %v176 = vpop.f32.mrf.mxu0
    %177 = vdwg.mxu0
    %v178 = vmul.f32 %v172, 0.70710677
    %v179 = vmul.f32 %v175, 0.70710677
    %v180 = verf.f32.pop %v178
    %v181 = verf.f32.pop %v179
    %v182 = vadd.f32 %v180, 1.0
    %v183 = vadd.f32 %v181, 1.0
    %v184 = vmul.f32 %v172, %v182
    %v185 = vmul.f32 %v175, %v183
    %v186 = vpack.c.bf16 %v185, %v184
    %v187 = vld [vmem:[#allocation7] sm:$0xf]
    %v188 = vld [vmem:[#allocation7 + $0x4] sm:$0xf]
    %v189 = vld [vmem:[#allocation7 + $0x8] sm:$0xf]
    %v190 = vld [vmem:[#allocation7 + $0xc] sm:$0xf]
    %v191 = vld [vmem:[#allocation7 + $0x10] sm:$0xf]
    %v192 = vld [vmem:[#allocation7 + $0x14] sm:$0xf]
    %v193 = vld [vmem:[#allocation7 + $0x18] sm:$0xf]
    %v194 = vld [vmem:[#allocation7 + $0x1c] sm:$0xf]
    %v195 = vld [vmem:[#allocation7 + $0x20] sm:$0xf]
    %v196 = vld [vmem:[#allocation7 + $0x24] sm:$0xf]
    %v197 = vld [vmem:[#allocation7 + $0x28] sm:$0xf]
    %v198 = vld [vmem:[#allocation7 + $0x2c] sm:$0xf]
    %v199 = vld [vmem:[#allocation7 + $0x30] sm:$0xf]
    %v200 = vld [vmem:[#allocation7 + $0x34] sm:$0xf]
    %v201 = vld [vmem:[#allocation7 + $0x38] sm:$0xf]
    %v202 = vld [vmem:[#allocation7 + $0x3c] sm:$0xf]
    %v203 = vld [vmem:[%s4] sm:$0x1]
    %v205 = vlaneseq
    %v206 = vshrl.u32 %v205, 7
    %v207 = vsub.s32 0, %v206
    %v208 = vrot.slane %v203, %v207
    %v226 = vunpack.c.l.b16 %v187
    %v227 = vunpack.c.l.b16 %v188
    %v228 = vunpack.c.l.b16 %v189
    %v229 = vunpack.c.l.b16 %v190
    %v230 = vunpack.c.l.b16 %v191
    %v231 = vunpack.c.l.b16 %v192
    %v232 = vunpack.c.l.b16 %v193
    %v233 = vunpack.c.l.b16 %v194
    %v234 = vunpack.c.l.b16 %v195
    %v235 = vunpack.c.l.b16 %v196
    %v236 = vunpack.c.l.b16 %v197
    %v237 = vunpack.c.l.b16 %v198
    %v238 = vunpack.c.l.b16 %v199
    %v239 = vunpack.c.l.b16 %v200
    %v240 = vunpack.c.l.b16 %v201
    %v241 = vunpack.c.l.b16 %v202
    %v242 = vpack.c.b16 %v227, %v226
    %v243 = vpack.c.b16 %v229, %v228
    %v244 = vpack.c.b16 %v231, %v230
    %v245 = vpack.c.b16 %v233, %v232
    %v246 = vpack.c.b16 %v235, %v234
    %v247 = vpack.c.b16 %v237, %v236
    %v248 = vpack.c.b16 %v239, %v238
    %v249 = vpack.c.b16 %v241, %v240
    %258 = vmatprep.subr.bf16.mxu0 0
    %259 = vmatpush1.bf16.msra.mxu0 %v249
    %260 = vmatprep.subr.bf16.mxu0 0
    %261 = vmatpush1.bf16.msra.mxu0 %v248
    %262 = vmatprep.subr.bf16.mxu0 0
    %263 = vmatpush1.bf16.msra.mxu0 %v247
    %264 = vmatprep.subr.bf16.mxu0 0
    %265 = vmatpush1.bf16.msra.mxu0 %v246
    %266 = vmatprep.subr.bf16.mxu0 0
    %267 = vmatpush1.bf16.msra.mxu0 %v245
    %268 = vmatprep.subr.bf16.mxu0 0
    %269 = vmatpush1.bf16.msra.mxu0 %v244
    %270 = vmatprep.subr.bf16.mxu0 0
    %271 = vmatpush1.bf16.msra.mxu0 %v243
    %272 = vmatprep.subr.bf16.mxu0 0
    %273 = vmatpush1.bf16.msra.mxu0 %v242
    %274 = vmatprep.subr.bf16.mxu0 0
    %275 = vmatpush2.bf16.msra.mxu0 0
    %276 = vmatprep.subr.bf16.mxu0 0
    %277 = vmatpush2.bf16.msra.mxu0 0
    %278 = vmatprep.subr.bf16.mxu0 0
    %279 = vmatpush2.bf16.msra.mxu0 0
    %280 = vmatprep.subr.bf16.mxu0 0
    %281 = vmatpush2.bf16.msra.mxu0 0
    %282 = vmatprep.subr.bf16.mxu0 0
    %283 = vmatpush2.bf16.msra.mxu0 0
    %284 = vmatprep.subr.bf16.mxu0 0
    %285 = vmatpush2.bf16.msra.mxu0 0
    %286 = vmatprep.subr.bf16.mxu0 0
    %287 = vmatpush2.bf16.msra.mxu0 0
    %288 = vmatprep.subr.bf16.mxu0 0
    %289 = vmatpush2.bf16.msra.mxu0 0
    %290 = vmatprep.mubr.bf16.mxu0 0
    %291 = vmatmul.mubr.bf16.gmra.mxu0 %v186
    %v292 = vpop.f32.mrf.mxu0
    %v293 = vadd.f32 %v208, %v292
    %v294 = vpop.f32.mrf.mxu0
    %v295 = vpop.f32.mrf.mxu0
    %v296 = vadd.f32 %v208, %v295
    %v297 = vpop.f32.mrf.mxu0
    %298 = vdwg.mxu0
    %299 = vst [vmem:[#allocation8] sm:$0xff] %v293
    %300 = vst [vmem:[#allocation8 + $0x8] sm:$0xff] %v296
    // Predicated region
    $region34: #{tpu_custom_call.1} parent=1 // pred_check
      _
    $region35: #{tpu_custom_call.1} parent=1 // pred_check_branch
      %302 = sbr.rel (0) target = $region37
    $region36: #{tpu_custom_call.1} parent=1 // pred_region
      %s304 = ssub.s32 256, 256
      %305 = vsyncadd [#allocation4], %s304
      %s306 = sshll.u32 [#allocation8], 4
      %s307 = int_to_ptr.vmem [resolvable:$true] %s306
      %312 = dma.vmem_to_hbm [thread:$0]  %s307, 256, %s5, [#allocation4], 128, 128, 8
    $region37: #{tpu_custom_call.1} parent=1 // pred_fallthru
      _
    // Predicated region
    $region38: #{tpu_custom_call.1} parent=1 // pred_check
      _
    $region39: #{tpu_custom_call.1} parent=1 // pred_check_branch
      %314 = sbr.rel (0) target = $region41
    $region40: #{tpu_custom_call.1} parent=1 // pred_region
      %315 = dma.done [#allocation4], 256
    $region41: #{tpu_custom_call.1} parent=1 // pred_fallthru
      _
    %316 = vsyncpa [#allocation3], 1
    %317 = vsyncpa [#allocation6], 1
    %318 = vsyncpa [#allocation4], 1

// kernel: tpu_custom_call.1
$region0: #{tpu_custom_call.1}
  #allocation0 [shape = 'u32[]', space=smem, size = 0x4, offset = 0x4, fixed_abs, tag = 'smem constant byte address 0x4 - core index']
  #allocation1 [shape = 'u32[144,128]{1,0:T(1,128)}', space=vmem, size = 0x12000, scoped, tag = 'internal scratch']
  %s0 = inlined_call_operand.hbm [shape: f32[16,128], index: 0, kind: input, shape index: {}]
  %s1 = inlined_call_operand.hbm [shape: bf16[128,128], index: 1, kind: input, shape index: {}]
  %s2 = inlined_call_operand.vmem [shape: f32[1,128], index: 2, kind: input, shape index: {}]
  %s3 = inlined_call_operand.hbm [shape: bf16[128,128], index: 3, kind: input, shape index: {}]
  %s4 = inlined_call_operand.vmem [shape: f32[1,128], index: 4, kind: input, shape index: {}]
  %s5 = inlined_call_operand.hbm [shape: f32[16,128], index: 5, kind: output, shape index: {}]
  %s6 = sld [smem:[#allocation0]]
  $region42: #{tpu_custom_call.1} parent=0
    _
  %s8 = ssub.s32 1, %s6
  %s9 = scalar_select 0, %s8, %s6
  $region1: #{tpu_custom_call.1} parent=0
    #allocation2 [shape = 'u8[8192]{0}', space=vmem, size = 0x2000, scoped, tag = 'input window, operand 0, single buffered']
    #allocation3 [shape = 's32[1]{0}', space=sflag, size = 0x4, scoped, tag = 'scoped memory for tpu_custom_call.1']
    #allocation4 [shape = 's32[1]{0}', space=sflag, size = 0x4, scoped, tag = 'scoped memory for tpu_custom_call.1']
    #allocation5 [shape = 'u8[32768]{0}', space=vmem, size = 0x8000, scoped, tag = 'input window, operand 1, single buffered']
    #allocation6 [shape = 's32[1]{0}', space=sflag, size = 0x4, scoped, tag = 'scoped memory for tpu_custom_call.1']
    #allocation7 [shape = 'u8[32768]{0}', space=vmem, size = 0x8000, scoped, tag = 'input window, operand 3, single buffered']
    #allocation8 [shape = 'u8[8192]{0}', space=vmem, size = 0x2000, scoped, tag = 'output window, operand 0, single buffered']
    %10 = vsyncpa [#allocation3], 0
    %11 = vsyncpa [#allocation6], 0
    %12 = vsyncpa [#allocation4], 0
    // Predicated region
    $region2: #{tpu_custom_call.1} parent=1 // pred_check
      _
    $region3: #{tpu_custom_call.1} parent=1 // pred_check_branch
      %14 = sbr.rel (0) target = $region5
    $region4: #{tpu_custom_call.1} parent=1 // pred_region
      %s16 = ssub.s32 256, 256
      %17 = vsyncadd [#allocation3], %s16
      %s18 = sshll.u32 [#allocation2], 4
      %s19 = int_to_ptr.vmem [resolvable:$true] %s18
      %24 = dma.hbm_to_vmem [thread:$0]  %s0, 256, %s19, [#allocation3], 128, 128, 8
    $region5: #{tpu_custom_call.1} parent=1 // pred_fallthru
      _
    // Predicated region
    $region6: #{tpu_custom_call.1} parent=1 // pred_check
      _
    $region7: #{tpu_custom_call.1} parent=1 // pred_check_branch
      %26 = sbr.rel (0) target = $region9
    $region8: #{tpu_custom_call.1} parent=1 // pred_region
      %s28 = ssub.s32 1024, 1024
      %29 = vsyncadd [#allocation6], %s28
      %s30 = sshll.u32 [#allocation5], 4
      %s31 = int_to_ptr.vmem [resolvable:$true] %s30
      %36 = dma.hbm_to_vmem [thread:$0]  %s1, 1024, %s31, [#allocation6], 64, 64, 4
    $region9: #{tpu_custom_call.1} parent=1 // pred_fallthru
      _
    // Predicated region
    $region10: #{tpu_custom_call.1} parent=1 // pred_check
      _
    $region11: #{tpu_custom_call.1} parent=1 // pred_check_branch
      %38 = sbr.rel (0) target = $region13
    $region12: #{tpu_custom_call.1} parent=1 // pred_region
      _
    $region13: #{tpu_custom_call.1} parent=1 // pred_fallthru
      _
    // Predicated region
    $region14: #{tpu_custom_call.1} parent=1 // pred_check
      _
    $region15: #{tpu_custom_call.1} parent=1 // pred_check_branch
      %40 = sbr.rel (0) target = $region17
    $region16: #{tpu_custom_call.1} parent=1 // pred_region
      %s42 = ssub.s32 1024, 1024
      %43 = vsyncadd [#allocation6], %s42
      %s44 = sshll.u32 [#allocation7], 4
      %s45 = int_to_ptr.vmem [resolvable:$true] %s44
      %50 = dma.hbm_to_vmem [thread:$0]  %s3, 1024, %s45, [#allocation6], 64, 64, 4
    $region17: #{tpu_custom_call.1} parent=1 // pred_fallthru
      _
    // Predicated region
    $region18: #{tpu_custom_call.1} parent=1 // pred_check
      _
    $region19: #{tpu_custom_call.1} parent=1 // pred_check_branch
      %52 = sbr.rel (0) target = $region21
    $region20: #{tpu_custom_call.1} parent=1 // pred_region
      _
    $region21: #{tpu_custom_call.1} parent=1 // pred_fallthru
      _
    // Predicated region
    $region22: #{tpu_custom_call.1} parent=1 // pred_check
      _
    $region23: #{tpu_custom_call.1} parent=1 // pred_check_branch
      %54 = sbr.rel (0) target = $region25
    $region24: #{tpu_custom_call.1} parent=1 // pred_region
      %55 = dma.done [#allocation3], 256
    $region25: #{tpu_custom_call.1} parent=1 // pred_fallthru
      _
    // Predicated region
    $region26: #{tpu_custom_call.1} parent=1 // pred_check
      _
    $region27: #{tpu_custom_call.1} parent=1 // pred_check_branch
      %57 = sbr.rel (0) target = $region29
    $region28: #{tpu_custom_call.1} parent=1 // pred_region
      %58 = dma.done [#allocation6], 1024
    $region29: #{tpu_custom_call.1} parent=1 // pred_fallthru
      _
    // Predicated region
    $region30: #{tpu_custom_call.1} parent=1 // pred_check
      _
    $region31: #{tpu_custom_call.1} parent=1 // pred_check_branch
      %60 = sbr.rel (0) target = $region33
    $region32: #{tpu_custom_call.1} parent=1 // pred_region
      %61 = dma.done [#allocation6], 1024
    $region33: #{tpu_custom_call.1} parent=1 // pred_fallthru
      _
    %v63 = vld [vmem:[#allocation2] sm:$0xff]
    %v64 = vld [vmem:[#allocation2 + $0x8] sm:$0xff]
    %v65 = vpack.c.bf16 %v64, %v63
    %v66 = vld [vmem:[#allocation5] sm:$0xf]
    %v67 = vld [vmem:[#allocation5 + $0x4] sm:$0xf]
    %v68 = vld [vmem:[#allocation5 + $0x8] sm:$0xf]
    %v69 = vld [vmem:[#allocation5 + $0xc] sm:$0xf]
    %v70 = vld [vmem:[#allocation5 + $0x10] sm:$0xf]
    %v71 = vld [vmem:[#allocation5 + $0x14] sm:$0xf]
    %v72 = vld [vmem:[#allocation5 + $0x18] sm:$0xf]
    %v73 = vld [vmem:[#allocation5 + $0x1c] sm:$0xf]
    %v74 = vld [vmem:[#allocation5 + $0x20] sm:$0xf]
    %v75 = vld [vmem:[#allocation5 + $0x24] sm:$0xf]
    %v76 = vld [vmem:[#allocation5 + $0x28] sm:$0xf]
    %v77 = vld [vmem:[#allocation5 + $0x2c] sm:$0xf]
    %v78 = vld [vmem:[#allocation5 + $0x30] sm:$0xf]
    %v79 = vld [vmem:[#allocation5 + $0x34] sm:$0xf]
    %v80 = vld [vmem:[#allocation5 + $0x38] sm:$0xf]
    %v81 = vld [vmem:[#allocation5 + $0x3c] sm:$0xf]
    %v82 = vld [vmem:[%s2] sm:$0x1]
    %v84 = vlaneseq
    %v85 = vshrl.u32 %v84, 7
    %v86 = vsub.s32 0, %v85
    %v87 = vrot.slane %v82, %v86
    %v105 = vunpack.c.l.b16 %v66
    %v106 = vunpack.c.l.b16 %v67
    %v107 = vunpack.c.l.b16 %v68
    %v108 = vunpack.c.l.b16 %v69
    %v109 = vunpack.c.l.b16 %v70
    %v110 = vunpack.c.l.b16 %v71
    %v111 = vunpack.c.l.b16 %v72
    %v112 = vunpack.c.l.b16 %v73
    %v113 = vunpack.c.l.b16 %v74
    %v114 = vunpack.c.l.b16 %v75
    %v115 = vunpack.c.l.b16 %v76
    %v116 = vunpack.c.l.b16 %v77
    %v117 = vunpack.c.l.b16 %v78
    %v118 = vunpack.c.l.b16 %v79
    %v119 = vunpack.c.l.b16 %v80
    %v120 = vunpack.c.l.b16 %v81
    %v121 = vpack.c.b16 %v106, %v105
    %v122 = vpack.c.b16 %v108, %v107
    %v123 = vpack.c.b16 %v110, %v109
    %v124 = vpack.c.b16 %v112, %v111
    %v125 = vpack.c.b16 %v114, %v113
    %v126 = vpack.c.b16 %v116, %v115
    %v127 = vpack.c.b16 %v118, %v117
    %v128 = vpack.c.b16 %v120, %v119
    %137 = vmatprep.subr.bf16.mxu0 0
    %138 = vmatpush1.bf16.msra.mxu0 %v128
    %139 = vmatprep.subr.bf16.mxu0 0
    %140 = vmatpush1.bf16.msra.mxu0 %v127
    %141 = vmatprep.subr.bf16.mxu0 0
    %142 = vmatpush1.bf16.msra.mxu0 %v126
    %143 = vmatprep.subr.bf16.mxu0 0
    %144 = vmatpush1.bf16.msra.mxu0 %v125
    %145 = vmatprep.subr.bf16.mxu0 0
    %146 = vmatpush1.bf16.msra.mxu0 %v124
    %147 = vmatprep.subr.bf16.mxu0 0
    %148 = vmatpush1.bf16.msra.mxu0 %v123
    %149 = vmatprep.subr.bf16.mxu0 0
    %150 = vmatpush1.bf16.msra.mxu0 %v122
    %151 = vmatprep.subr.bf16.mxu0 0
    %152 = vmatpush1.bf16.msra.mxu0 %v121
    %153 = vmatprep.subr.bf16.mxu0 0
    %154 = vmatpush2.bf16.msra.mxu0 0
    %155 = vmatprep.subr.bf16.mxu0 0
    %156 = vmatpush2.bf16.msra.mxu0 0
    %157 = vmatprep.subr.bf16.mxu0 0
    %158 = vmatpush2.bf16.msra.mxu0 0
    %159 = vmatprep.subr.bf16.mxu0 0
    %160 = vmatpush2.bf16.msra.mxu0 0
    %161 = vmatprep.subr.bf16.mxu0 0
    %162 = vmatpush2.bf16.msra.mxu0 0
    %163 = vmatprep.subr.bf16.mxu0 0
    %164 = vmatpush2.bf16.msra.mxu0 0
    %165 = vmatprep.subr.bf16.mxu0 0
    %166 = vmatpush2.bf16.msra.mxu0 0
    %167 = vmatprep.subr.bf16.mxu0 0
    %168 = vmatpush2.bf16.msra.mxu0 0
    %169 = vmatprep.mubr.bf16.mxu0 0
    %170 = vmatmul.mubr.bf16.gmra.mxu0 %v65
    %v171 = vpop.f32.mrf.mxu0
    %v172 = vadd.f32 %v87, %v171
    %v173 = vpop.f32.mrf.mxu0
    %v174 = vpop.f32.mrf.mxu0
    %v175 = vadd.f32 %v87, %v174
    %v176 = vpop.f32.mrf.mxu0
    %177 = vdwg.mxu0
    %v178 = vmul.f32 %v172, 0.70710677
    %v179 = vmul.f32 %v175, 0.70710677
    %v180 = verf.f32.pop %v178
    %v181 = verf.f32.pop %v179
    %v182 = vadd.f32 %v180, 1.0
    %v183 = vadd.f32 %v181, 1.0
    %v184 = vmul.f32 %v172, %v182
    %v185 = vmul.f32 %v175, %v183
    %v186 = vpack.c.bf16 %v185, %v184
    %v187 = vld [vmem:[#allocation7] sm:$0xf]
    %v188 = vld [vmem:[#allocation7 + $0x4] sm:$0xf]
    %v189 = vld [vmem:[#allocation7 + $0x8] sm:$0xf]
    %v190 = vld [vmem:[#allocation7 + $0xc] sm:$0xf]
    %v191 = vld [vmem:[#allocation7 + $0x10] sm:$0xf]
    %v192 = vld [vmem:[#allocation7 + $0x14] sm:$0xf]
    %v193 = vld [vmem:[#allocation7 + $0x18] sm:$0xf]
    %v194 = vld [vmem:[#allocation7 + $0x1c] sm:$0xf]
    %v195 = vld [vmem:[#allocation7 + $0x20] sm:$0xf]
    %v196 = vld [vmem:[#allocation7 + $0x24] sm:$0xf]
    %v197 = vld [vmem:[#allocation7 + $0x28] sm:$0xf]
    %v198 = vld [vmem:[#allocation7 + $0x2c] sm:$0xf]
    %v199 = vld [vmem:[#allocation7 + $0x30] sm:$0xf]
    %v200 = vld [vmem:[#allocation7 + $0x34] sm:$0xf]
    %v201 = vld [vmem:[#allocation7 + $0x38] sm:$0xf]
    %v202 = vld [vmem:[#allocation7 + $0x3c] sm:$0xf]
    %v203 = vld [vmem:[%s4] sm:$0x1]
    %v205 = vlaneseq
    %v206 = vshrl.u32 %v205, 7
    %v207 = vsub.s32 0, %v206
    %v208 = vrot.slane %v203, %v207
    %v226 = vunpack.c.l.b16 %v187
    %v227 = vunpack.c.l.b16 %v188
    %v228 = vunpack.c.l.b16 %v189
    %v229 = vunpack.c.l.b16 %v190
    %v230 = vunpack.c.l.b16 %v191
    %v231 = vunpack.c.l.b16 %v192
    %v232 = vunpack.c.l.b16 %v193
    %v233 = vunpack.c.l.b16 %v194
    %v234 = vunpack.c.l.b16 %v195
    %v235 = vunpack.c.l.b16 %v196
    %v236 = vunpack.c.l.b16 %v197
    %v237 = vunpack.c.l.b16 %v198
    %v238 = vunpack.c.l.b16 %v199
    %v239 = vunpack.c.l.b16 %v200
    %v240 = vunpack.c.l.b16 %v201
    %v241 = vunpack.c.l.b16 %v202
    %v242 = vpack.c.b16 %v227, %v226
    %v243 = vpack.c.b16 %v229, %v228
    %v244 = vpack.c.b16 %v231, %v230
    %v245 = vpack.c.b16 %v233, %v232
    %v246 = vpack.c.b16 %v235, %v234
    %v247 = vpack.c.b16 %v237, %v236
    %v248 = vpack.c.b16 %v239, %v238
    %v249 = vpack.c.b16 %v241, %v240
    %258 = vmatprep.subr.bf16.mxu0 0
    %259 = vmatpush1.bf16.msra.mxu0 %v249
    %260 = vmatprep.subr.bf16.mxu0 0
    %261 = vmatpush1.bf16.msra.mxu0 %v248
    %262 = vmatprep.subr.bf16.mxu0 0
    %263 = vmatpush1.bf16.msra.mxu0 %v247
    %264 = vmatprep.subr.bf16.mxu0 0
    %265 = vmatpush1.bf16.msra.mxu0 %v246
    %266 = vmatprep.subr.bf16.mxu0 0
    %267 = vmatpush1.bf16.msra.mxu0 %v245
    %268 = vmatprep.subr.bf16.mxu0 0
    %269 = vmatpush1.bf16.msra.mxu0 %v244
    %270 = vmatprep.subr.bf16.mxu0 0
    %271 = vmatpush1.bf16.msra.mxu0 %v243
    %272 = vmatprep.subr.bf16.mxu0 0
    %273 = vmatpush1.bf16.msra.mxu0 %v242
    %274 = vmatprep.subr.bf16.mxu0 0
    %275 = vmatpush2.bf16.msra.mxu0 0
    %276 = vmatprep.subr.bf16.mxu0 0
    %277 = vmatpush2.bf16.msra.mxu0 0
    %278 = vmatprep.subr.bf16.mxu0 0
    %279 = vmatpush2.bf16.msra.mxu0 0
    %280 = vmatprep.subr.bf16.mxu0 0
    %281 = vmatpush2.bf16.msra.mxu0 0
    %282 = vmatprep.subr.bf16.mxu0 0
    %283 = vmatpush2.bf16.msra.mxu0 0
    %284 = vmatprep.subr.bf16.mxu0 0
    %285 = vmatpush2.bf16.msra.mxu0 0
    %286 = vmatprep.subr.bf16.mxu0 0
    %287 = vmatpush2.bf16.msra.mxu0 0
    %288 = vmatprep.subr.bf16.mxu0 0
    %289 = vmatpush2.bf16.msra.mxu0 0
    %290 = vmatprep.mubr.bf16.mxu0 0
    %291 = vmatmul.mubr.bf16.gmra.mxu0 %v186
    %v292 = vpop.f32.mrf.mxu0
    %v293 = vadd.f32 %v208, %v292
    %v294 = vpop.f32.mrf.mxu0
    %v295 = vpop.f32.mrf.mxu0
    %v296 = vadd.f32 %v208, %v295
    %v297 = vpop.f32.mrf.mxu0
    %298 = vdwg.mxu0
    %299 = vst [vmem:[#allocation8] sm:$0xff] %v293
    %300 = vst [vmem:[#allocation8 + $0x8] sm:$0xff] %v296
    // Predicated region
    $region34: #{tpu_custom_call.1} parent=1 // pred_check
      _
    $region35: #{tpu_custom_call.1} parent=1 // pred_check_branch
      %302 = sbr.rel (0) target = $region37
    $region36: #{tpu_custom_call.1} parent=1 // pred_region
      %s304 = ssub.s32 256, 256
      %305 = vsyncadd [#allocation4], %s304
      %s306 = sshll.u32 [#allocation8], 4
      %s307 = int_to_ptr.vmem [resolvable:$true] %s306
      %312 = dma.vmem_to_hbm [thread:$0]  %s307, 256, %s5, [#allocation4], 128, 128, 8
    $region37: #{tpu_custom_call.1} parent=1 // pred_fallthru
      _
    // Predicated region
    $region38: #{tpu_custom_call.1} parent=1 // pred_check
      _
    $region39: #{tpu_custom_call.1} parent=1 // pred_check_branch
      %314 = sbr.rel (0) target = $region41
    $region40: #{tpu_custom_call.1} parent=1 // pred_region
      %315 = dma.done [#allocation4], 256
    $region41: #{tpu_custom_call.1} parent=1 // pred_fallthru
      _
    %316 = vsyncpa [#allocation3], 1
    %317 = vsyncpa [#allocation6], 1
    %318 = vsyncpa [#allocation4], 1

</llo_original>
